<compile_context>
chip_gen: v7x
topology: tpu7x:2x2x1
jax: 0.10.0
libtpu: 0.0.40
codegen_flags: <defaults>
</compile_context>

<pallas_src>
import functools

import jax
import jax.numpy as jnp
from jax.experimental import pallas as pl
from jax.experimental.pallas import tpu as pltpu


def _round_up(x, m):
    return ((x + m - 1) // m) * m


def _softplus(x):
    # Numerically-stable softplus; BCEWithLogitsLoss(logits, ones) == mean(softplus(-logits)).
    return jnp.maximum(x, 0.0) + jnp.log(1.0 + jnp.exp(-jnp.abs(x)))


def _dysat_loss_kernel(idx_ref, sw_ref, z_ref, out_ref, *, n_pad, tile_e):
    emb = z_ref[0]                               # (D, N_pad) embeddings at time t
    idx = idx_ref[0]                             # (1, 2*tile_e) int32: [sources | targets]
    sw = sw_ref[0]                               # (2, tile_e) f32: [sign; weight]
    sign = sw[0:1, :]
    weight = sw[1:2, :]

    # Fused gather of source AND target embeddings in one matmul on the otherwise
    # idle MXU: one-hot column selection.
    iota_n = jax.lax.broadcasted_iota(jnp.int32, (n_pad, 2 * tile_e), 0)
    onehot = (iota_n == idx).astype(jnp.float32).astype(jnp.bfloat16)   # exact 0/1 in bf16

    if emb.dtype == jnp.float32:
        # 3-way bf16 split: e1 + e2 + e3 reconstructs emb to f32 precision, and every
        # single-pass bf16 matmul against the exact 0/1 one-hot is an exact row
        # selection -> same result as precision=HIGHEST at half the MXU passes.
        e1 = emb.astype(jnp.bfloat16)
        r1 = emb - e1.astype(jnp.float32)
        e2 = r1.astype(jnp.bfloat16)
        e3 = (r1 - e2.astype(jnp.float32)).astype(jnp.bfloat16)
        g = (jnp.dot(e1, onehot, preferred_element_type=jnp.float32)
             + jnp.dot(e2, onehot, preferred_element_type=jnp.float32)
             + jnp.dot(e3, onehot, preferred_element_type=jnp.float32))
    else:  # bf16 embeddings: single MXU pass
        g = jnp.dot(emb, onehot, preferred_element_type=jnp.float32)

    # (D, 2*tile_e): first tile_e lanes = source embeddings, last tile_e = targets.
    # tile_e is a multiple of 128 so this lane slice is layout-free.
    src_emb = g[:, :tile_e]
    tgt_emb = g[:, tile_e:]
    dots = jnp.sum(src_emb * tgt_emb, axis=0, keepdims=True)            # (1, tile_e)

    # pos edges: sign=-1, weight=1/E_pos -> softplus(-pos_score)/E_pos
    # neg edges: sign=+1, weight=1/E_neg -> softplus(dot) == softplus(-neg_score), /E_neg
    # padded edges: weight=0 (mask stays on the weight, never on the logit).
    vals = weight * _softplus(sign * dots)                               # (1, tile_e)
    out_ref[...] = jnp.sum(vals, axis=1, keepdims=True).reshape(1, 1, 1, 1)


_VMEM_CEILING_BYTES = 48 * 1024 * 1024   # v7x-safe (64 MiB physical); raise to ~96 MiB on v5e/v6e.


def _vmem_budget_bytes(d, n_pad, tile_e, z_itemsize):
    slab = 2 * d * n_pad * z_itemsize           # double-buffered (1, D, N_pad) z block
    splits = 3 * d * n_pad * 2                  # in-kernel bf16 split temporaries (f32 path)
    onehot = n_pad * 2 * tile_e * (4 + 4 + 2)   # iota + f32 + bf16 one-hot temporaries
    gathered = 4 * d * 2 * tile_e * 4           # per-split matmul results + running sum
    small = 4 * 2 * tile_e * 4 + (1 << 20)      # idx / sign-weight blocks + slack
    return slab + splits + onehot + gathered + small


def dysat_loss(z, pos_edge_index, neg_edge_index, *, edge_tile=512,
               vmem_ceiling_bytes=_VMEM_CEILING_BYTES):
    """z: [N, T, D]; pos/neg_edge_index: [T, 2, E_pos] / [T, 2, E_neg] int -> scalar loss."""
    N, T, D = z.shape
    e_pos = pos_edge_index.shape[-1]
    e_neg = neg_edge_index.shape[-1]
    e_tot = e_pos + e_neg
    if e_tot == 0:
        return jnp.float32(0.0)

    if z.dtype != jnp.float32 and z.dtype != jnp.bfloat16:
        z = z.astype(jnp.float32)

    # Pad node axis (gather matmul K / slab lane axis) to a multiple of 128:
    # unmasked (8,128) tiles + full MXU K occupancy. Padded node rows are never
    # selected by the one-hot, so the result is unchanged.
    n_pad = _round_up(N, 128)

    # --- edge tiling, sized against the VMEM budget ---------------------------
    tile_e = _round_up(min(edge_tile, _round_up(e_tot, 128)), 128)
    if T == 1 and e_tot > 128:
        # Keep >= 2 edge tiles so v7x megacore has a parallel axis to shard even
        # with a single time step (for T > 1 the outer time axis is already parallel).
        tile_e = min(tile_e, max(128, _round_up((e_tot + 1) // 2, 128)))
    while tile_e > 128 and _vmem_budget_bytes(D, n_pad, tile_e, z.dtype.itemsize) > vmem_ceiling_bytes:
        tile_e -= 128
    e_pad = _round_up(e_tot, tile_e)
    e_tiles = e_pad // tile_e
    budget = _vmem_budget_bytes(D, n_pad, tile_e, z.dtype.itemsize)
    vmem_limit = int(min(max(2 * budget, 8 << 20), vmem_ceiling_bytes))
    # TODO(synk): for very large node counts N the (N_pad, 2*tile_e) one-hot build and the
    # (D, N_pad) slab outgrow VMEM/VALU; add an N-tiled grid axis (partial one-hot matmuls
    # accumulated over node chunks) or a scalar-prefetch-driven DMA row gather.

    # --- per-edge index stream, laid out as [src_tile | tgt_tile] per block ----
    src = jnp.concatenate([pos_edge_index[:, 0, :], neg_edge_index[:, 0, :]], axis=-1).astype(jnp.int32)
    tgt = jnp.concatenate([pos_edge_index[:, 1, :], neg_edge_index[:, 1, :]], axis=-1).astype(jnp.int32)
    if e_pad != e_tot:
        src = jnp.pad(src, ((0, 0), (0, e_pad - e_tot)))
        tgt = jnp.pad(tgt, ((0, 0), (0, e_pad - e_tot)))
    src = src.reshape(T, e_tiles, tile_e)
    tgt = tgt.reshape(T, e_tiles, tile_e)
    idx = jnp.concatenate([src, tgt], axis=-1).reshape(T, 1, e_tiles * 2 * tile_e)

    # --- per-edge sign / exact-mean weight / pad mask (time-invariant) ---------
    lane = jnp.arange(e_pad, dtype=jnp.int32)
    is_pos = lane < e_pos
    is_valid = lane < e_tot
    sign = jnp.where(is_pos, -1.0, 1.0).astype(jnp.float32)
    # Exact per-group means (1/E_pos, 1/E_neg) so tiling/padding never biases the loss;
    # max(., 1) guards degenerate empty groups (their lanes are masked to 0 anyway).
    weight = jnp.where(is_pos, 1.0 / max(e_pos, 1), 1.0 / max(e_neg, 1)).astype(jnp.float32)
    weight = jnp.where(is_valid, weight, 0.0)
    sw = jnp.stack([sign.reshape(e_tiles, tile_e), weight.reshape(e_tiles, tile_e)], axis=1)

    # [T, D, N_pad]: nodes on lanes so the in-kernel gather is a plain matmul; with time
    # as the OUTER grid axis the per-t slab is fetched once per time step, not per edge tile.
    # TODO(synk): produce z in [T, D, N] layout upstream to avoid this one-off transpose.
    zt = jnp.transpose(z, (1, 2, 0))
    if n_pad != N:
        zt = jnp.pad(zt, ((0, 0), (0, 0), (0, n_pad - N)))

    kernel = functools.partial(_dysat_loss_kernel, n_pad=n_pad, tile_e=tile_e)

    partials = pl.pallas_call(
        kernel,
        out_shape=jax.ShapeDtypeStruct((T, e_tiles, 1, 1), jnp.float32),
        grid_spec=pltpu.PrefetchScalarGridSpec(
            num_scalar_prefetch=0,
            grid=(T, e_tiles),                    # time OUTER, edge tiles INNER
            in_specs=[
                pl.BlockSpec((1, 1, 2 * tile_e), lambda t, e: (t, 0, e)),
                pl.BlockSpec((1, 2, tile_e), lambda t, e: (e, 0, 0)),
                pl.BlockSpec((1, D, n_pad), lambda t, e: (t, 0, 0)),  # resident across e
            ],
            out_specs=pl.BlockSpec((1, 1, 1, 1), lambda t, e: (t, e, 0, 0)),
        ),
        compiler_params=pltpu.CompilerParams(
            dimension_semantics=("parallel", "parallel"),
            vmem_limit_bytes=vmem_limit,
        ),
    )(idx, sw, zt)
    return jnp.sum(partials)


def dysat_loss_ref(z, pos_edge_index, neg_edge_index):
    """Pure-JAX reference matching the PyTorch forward loop."""
    T = z.shape[1]
    total = jnp.float32(0.0)
    for t in range(T):
        emb = z[:, t, :].astype(jnp.float32)
        pos_score = jnp.sum(emb[pos_edge_index[t, 0]] * emb[pos_edge_index[t, 1]], axis=1)
        neg_score = -jnp.sum(emb[neg_edge_index[t, 0]] * emb[neg_edge_index[t, 1]], axis=1)
        pos_loss = jnp.mean(jnp.logaddexp(0.0, -pos_score))
        neg_loss = jnp.mean(jnp.logaddexp(0.0, -neg_score))
        total = total + pos_loss + neg_loss
    return total


if __name__ == "__main__":
    key = jax.random.PRNGKey(0)
    k_z, k_p, k_n = jax.random.split(key, 3)

    # nodes, time steps, hidden, pos/neg edges per step (E_neg != E_pos on purpose
    # to exercise the separate-mean weights and the edge padding path).
    N, T, D = 64, 4, 128
    E_pos, E_neg = 128, 96
    z = 0.1 * jax.random.normal(k_z, (N, T, D), dtype=jnp.float32)
    pos_edge_index = jax.random.randint(k_p, (T, 2, E_pos), 0, N, dtype=jnp.int32)
    neg_edge_index = jax.random.randint(k_n, (T, 2, E_neg), 0, N, dtype=jnp.int32)

    ref = dysat_loss_ref(z, pos_edge_index, neg_edge_index)

    # Multi-tile path (2 edge tiles + padded edges; exercises the inner grid axis).
    loss_tiled = dysat_loss(z, pos_edge_index, neg_edge_index, edge_tile=128)
    jax.block_until_ready(loss_tiled)
    assert jnp.allclose(loss_tiled, ref, rtol=1e-4, atol=1e-4), (loss_tiled, ref)

    # Single-tile-per-step path (default tile size).
    loss_single = dysat_loss(z, pos_edge_index, neg_edge_index)
    jax.block_until_ready(loss_single)
    assert jnp.allclose(loss_single, ref, rtol=1e-4, atol=1e-4), (loss_single, ref)

    # TODO(synk): predict() relies on sklearn roc_auc_score / average_precision_score,
    # which are host-side metrics with no Pallas equivalent; not implemented.
    print("KERNEL_OK")
</pallas_src>

<mosaic_0001>
module attributes {stable_mosaic.version = 11 : i64} {
  func.func @_dysat_loss_kernel(%arg0: i32, %arg1: i32, %arg2: memref<1x1x256xi32, #tpu.memory_space<vmem>>, %arg3: memref<1x2x128xf32, #tpu.memory_space<vmem>>, %arg4: memref<1x128x128xf32, #tpu.memory_space<vmem>>, %arg5: memref<1x1x1x1xf32, #tpu.memory_space<vmem>>) attributes {dimension_semantics = [#tpu.dimension_semantics<parallel>, #tpu.dimension_semantics<parallel>], iteration_bounds = array<i64: 4, 2>, scalar_prefetch = 0 : i64, scratch_operands = 0 : i64, tpu.core_type = #tpu.core_type<tc>, window_params = [{transform_indices = @transform_0, window_bounds = array<i64: 1, 1, 256>}, {transform_indices = @transform_1, window_bounds = array<i64: 1, 2, 128>}, {transform_indices = @transform_2, window_bounds = array<i64: 1, 128, 128>}, {transform_indices = @transform_3, window_bounds = array<i64: 1, 1, 1, 1>}]} {
    %c0 = arith.constant 0 : index
    %c0_0 = arith.constant 0 : index
    %c0_1 = arith.constant 0 : index
    %0 = vector.load %arg4[%c0, %c0_0, %c0_1] : memref<1x128x128xf32, #tpu.memory_space<vmem>>, vector<1x128x128xf32>
    %1 = vector.shape_cast %0 : vector<1x128x128xf32> to vector<128x128xf32>
    %c0_2 = arith.constant 0 : index
    %c0_3 = arith.constant 0 : index
    %c0_4 = arith.constant 0 : index
    %2 = vector.load %arg2[%c0_2, %c0_3, %c0_4] : memref<1x1x256xi32, #tpu.memory_space<vmem>>, vector<1x1x256xi32>
    %3 = vector.shape_cast %2 : vector<1x1x256xi32> to vector<1x256xi32>
    %c0_5 = arith.constant 0 : index
    %c0_6 = arith.constant 0 : index
    %c0_7 = arith.constant 0 : index
    %4 = vector.load %arg3[%c0_5, %c0_6, %c0_7] : memref<1x2x128xf32, #tpu.memory_space<vmem>>, vector<1x2x128xf32>
    %5 = vector.shape_cast %4 : vector<1x2x128xf32> to vector<2x128xf32>
    %6 = vector.extract_strided_slice %5 {offsets = [0, 0], sizes = [1, 128], strides = [1, 1]} : vector<2x128xf32> to vector<1x128xf32>
    %7 = vector.extract_strided_slice %5 {offsets = [1, 0], sizes = [1, 128], strides = [1, 1]} : vector<2x128xf32> to vector<1x128xf32>
    %8 = tpu.iota {dimensions = array<i32: 0>} : vector<128x256xi32>
    %9 = vector.broadcast %3 : vector<1x256xi32> to vector<128x256xi32>
    %10 = arith.cmpi eq, %8, %9 : vector<128x256xi32>
    %11 = arith.extui %10 : vector<128x256xi1> to vector<128x256xi32>
    %12 = arith.sitofp %11 : vector<128x256xi32> to vector<128x256xf32>
    %13 = arith.truncf %12 : vector<128x256xf32> to vector<128x256xbf16>
    %14 = arith.truncf %1 : vector<128x128xf32> to vector<128x128xbf16>
    %15 = arith.extf %14 : vector<128x128xbf16> to vector<128x128xf32>
    %16 = arith.subf %1, %15 : vector<128x128xf32>
    %17 = arith.truncf %16 : vector<128x128xf32> to vector<128x128xbf16>
    %18 = arith.extf %17 : vector<128x128xbf16> to vector<128x128xf32>
    %19 = arith.subf %16, %18 : vector<128x128xf32>
    %20 = arith.truncf %19 : vector<128x128xf32> to vector<128x128xbf16>
    %cst = arith.constant dense<0.000000e+00> : vector<128x256xf32>
    %21 = tpu.matmul %14, %13, %cst {dimension_numbers = #tpu.dot_dimension_numbers<[1], [0], [0], [1], [0, 0, 1, 1], [], []>} : vector<128x128xbf16>, vector<128x256xbf16>, vector<128x256xf32> -> vector<128x256xf32>
    %cst_8 = arith.constant dense<0.000000e+00> : vector<128x256xf32>
    %22 = tpu.matmul %17, %13, %cst_8 {dimension_numbers = #tpu.dot_dimension_numbers<[1], [0], [0], [1], [0, 0, 1, 1], [], []>} : vector<128x128xbf16>, vector<128x256xbf16>, vector<128x256xf32> -> vector<128x256xf32>
    %23 = arith.addf %21, %22 : vector<128x256xf32>
    %cst_9 = arith.constant dense<0.000000e+00> : vector<128x256xf32>
    %24 = tpu.matmul %20, %13, %cst_9 {dimension_numbers = #tpu.dot_dimension_numbers<[1], [0], [0], [1], [0, 0, 1, 1], [], []>} : vector<128x128xbf16>, vector<128x256xbf16>, vector<128x256xf32> -> vector<128x256xf32>
    %25 = arith.addf %23, %24 : vector<128x256xf32>
    %26 = vector.extract_strided_slice %25 {offsets = [0, 0], sizes = [128, 128], strides = [1, 1]} : vector<128x256xf32> to vector<128x128xf32>
    %27 = vector.extract_strided_slice %25 {offsets = [0, 128], sizes = [128, 128], strides = [1, 1]} : vector<128x256xf32> to vector<128x128xf32>
    %28 = arith.mulf %26, %27 : vector<128x128xf32>
    %cst_10 = arith.constant dense<0.000000e+00> : vector<128xf32>
    %29 = vector.multi_reduction <add>, %28, %cst_10 [0] : vector<128x128xf32> to vector<128xf32>
    %30 = vector.shape_cast %29 : vector<128xf32> to vector<1x128xf32>
    %31 = arith.mulf %6, %30 : vector<1x128xf32>
    %cst_11 = arith.constant 0.000000e+00 : f32
    %32 = vector.broadcast %cst_11 : f32 to vector<1x128xf32>
    %33 = arith.maximumf %31, %32 : vector<1x128xf32>
    %34 = math.absf %31 : vector<1x128xf32>
    %cst_12 = arith.constant 0.000000e+00 : f32
    %35 = vector.broadcast %cst_12 : f32 to vector<1x128xf32>
    %36 = arith.subf %35, %34 : vector<1x128xf32>
    %37 = math.exp %36 : vector<1x128xf32>
    %cst_13 = arith.constant 1.000000e+00 : f32
    %38 = vector.broadcast %cst_13 : f32 to vector<1x128xf32>
    %39 = arith.addf %38, %37 : vector<1x128xf32>
    %40 = math.log %39 : vector<1x128xf32>
    %41 = arith.addf %33, %40 : vector<1x128xf32>
    %42 = arith.mulf %7, %41 : vector<1x128xf32>
    %cst_14 = arith.constant dense<0.000000e+00> : vector<1xf32>
    %43 = vector.multi_reduction <add>, %42, %cst_14 [1] : vector<1x128xf32> to vector<1xf32>
    %44 = vector.shape_cast %43 : vector<1xf32> to vector<1x1xf32>
    %45 = vector.shape_cast %44 : vector<1x1xf32> to vector<1x1x1x1xf32>
    %c0_15 = arith.constant 0 : index
    %c0_16 = arith.constant 0 : index
    %c0_17 = arith.constant 0 : index
    %c0_18 = arith.constant 0 : index
    %46 = vector.load %arg5[%c0_15, %c0_16, %c0_17, %c0_18] : memref<1x1x1x1xf32, #tpu.memory_space<vmem>>, vector<1x1x1x1xf32>
    tpu.vector_store %arg5[%c0_15, %c0_16, %c0_17, %c0_18], %45 {strides = array<i32>} : memref<1x1x1x1xf32, #tpu.memory_space<vmem>>, vector<1x1x1x1xf32>,
    return
  }
  func.func @transform_0(%arg0: i32, %arg1: i32) -> (i32, i32, i32) {
    %c0_i32 = arith.constant 0 : i32
    %c0_i32_0 = arith.constant 0 : i32
    return %arg0, %c0_i32, %arg1 : i32, i32, i32
  }
  func.func @transform_1(%arg0: i32, %arg1: i32) -> (i32, i32, i32) {
    %c0_i32 = arith.constant 0 : i32
    %c0_i32_0 = arith.constant 0 : i32
    %c0_i32_1 = arith.constant 0 : i32
    return %arg1, %c0_i32, %c0_i32_0 : i32, i32, i32
  }
  func.func @transform_2(%arg0: i32, %arg1: i32) -> (i32, i32, i32) {
    %c0_i32 = arith.constant 0 : i32
    %c0_i32_0 = arith.constant 0 : i32
    %c0_i32_1 = arith.constant 0 : i32
    return %arg0, %c0_i32, %c0_i32_0 : i32, i32, i32
  }
  func.func @transform_3(%arg0: i32, %arg1: i32) -> (i32, i32, i32, i32) {
    %c0_i32 = arith.constant 0 : i32
    %c0_i32_0 = arith.constant 0 : i32
    %c0_i32_1 = arith.constant 0 : i32
    return %arg0, %arg1, %c0_i32, %c0_i32_0 : i32, i32, i32, i32
  }
}

</mosaic_0001>

<llo_original>
// kernel: tpu_custom_call.1
$region0: #{tpu_custom_call.1}
  #allocation0 [shape = 'u32[]', space=smem, size = 0x4, offset = 0x4, fixed_abs, tag = 'smem constant byte address 0x4 - core index']
  #allocation1 [shape = 'u32[144,128]{1,0:T(1,128)}', space=vmem, size = 0x12000, scoped, tag = 'internal scratch']
  %s0 = inlined_call_operand.hbm [shape: s32[4,1,512], index: 0, kind: input, shape index: {}]
  %s1 = inlined_call_operand.hbm [shape: f32[2,2,128], index: 1, kind: input, shape index: {}]
  %s2 = inlined_call_operand.hbm [shape: f32[4,128,128], index: 2, kind: input, shape index: {}]
  %s3 = inlined_call_operand.vmem [shape: f32[4,2,1,1], index: 3, kind: output, shape index: {}]
  %s4 = sld [smem:[#allocation0]]
  $region57: #{tpu_custom_call.1} parent=0
    _
  %s6 = ssub.s32 1, %s4
  %s7 = scalar_select 0, %s6, %s4
  $region1: #{tpu_custom_call.1} parent=0
    #allocation2 [shape = 'u8[2048]{0}', space=vmem, size = 0x800, scoped, tag = 'input window, operand 0']
    #allocation3 [shape = 's32[2]{0}', space=sflag, size = 0x8, scoped, tag = 'scoped memory for tpu_custom_call.1']
    #allocation4 [shape = 'u8[2048]{0}', space=vmem, size = 0x800, scoped, tag = 'input window, operand 1']
    #allocation5 [shape = 's32[2]{0}', space=sflag, size = 0x8, scoped, tag = 'scoped memory for tpu_custom_call.1']
    #allocation6 [shape = 'u8[131072]{0}', space=vmem, size = 0x20000, scoped, tag = 'input window, operand 2']
    %8 = vsyncpa [#allocation3], 0
    %s9 = scalar_lea.sflag [#allocation3], 1
    %10 = vsyncpa %s9, 0
    %11 = vsyncpa [#allocation5], 0
    %s12 = scalar_lea.sflag [#allocation5], 1
    %13 = vsyncpa %s12, 0
    loop: start=0, step=1, limit=10
    $region2: #{tpu_custom_call.1} parent=1 // loop_pre_header
      _
    $region3: #{tpu_custom_call.1} parent=1 // loop_header
      %s15 = sphi 0, %s19
      %p16 = scmp.ge.s32.totalorder %s15, 10
      %s22 = sphi 0, %s34
      %s23 = sphi 0, %s30
      %s24 = sphi 0, %s22
      %s25 = sphi 0, %s23
      %s26 = sphi 0, %s24
      %s27 = sphi 0, %s25
      %s39 = sphi 0, %s41
      %s42 = sphi 0, %s39
      %s43 = sphi 0, %s42
      %s59 = sphi 0, %s43
      %s65 = sphi 0, %s67
      %s68 = sphi 0, %s65
      %s69 = sphi 0, %s68
      %s85 = sphi 0, %s69
      %s91 = sphi 0, %s93
      %s94 = sphi 0, %s91
      %s95 = sphi 0, %s94
      %s111 = sphi 0, %s95
      %s119 = sphi 0, %s121
      %s122 = sphi 0, %s119
      %s123 = sphi 0, %s122
      %s139 = sphi 0, %s123
    $region4: #{tpu_custom_call.1} parent=1 // loop_header_branch
      %18 = sbr.rel (%p16) target = $region8
    $region5: #{tpu_custom_call.1} parent=1 // loop_body
      %s20 = ssub.s32 %s15, 1
      %s21 = ssub.s32 %s15, 2
      %s28 = sadd.s32 1, %s23
      %p29 = scmp.ge.s32.totalorder %s28, 2
      %s30 = scalar_select %p29, 0, %s28
      %s31 = sadd.s32 1, %s22
      %s32 = scalar_select %p29, %s31, %s22
      %p33 = scmp.ge.s32.totalorder %s32, 4
      %s34 = scalar_select %p33, 0, %s32
      %s35 = ssub.s32 %s22, %s34
      %s36 = ssub.s32 %s23, %s30
      %s37 = sor.u32 %s35, %s36
      %p38 = scmp.eq.s32.totalorder %s37, 0
      %s40 = sadd.s32 %s39, 1
      %s41 = scalar_select %p38, %s39, %s40
      %p44 = pneg %p38
      %p45 = scmp.eq.s32.totalorder %s15, 7
      %p46 = por %p44, %p45
      %p47 = scmp.ne.s32.totalorder %s39, %s42
      %p48 = scmp.eq.s32.totalorder %s15, 0
      %p49 = por %p47, %p48
      %p50 = scmp.ne.s32.totalorder %s39, %s42
      %p51 = scmp.eq.s32.totalorder %s20, 7
      %p52 = por %p50, %p51
      %p53 = scmp.ne.s32.totalorder %s42, %s43
      %p54 = scmp.eq.s32.totalorder %s20, 0
      %p55 = por %p53, %p54
      %p56 = scmp.ne.s32.totalorder %s42, %s43
      %p57 = scmp.eq.s32.totalorder %s21, 7
      %p58 = por %p56, %p57
      %p60 = scmp.ne.s32.totalorder %s43, %s59
      %p61 = scmp.eq.s32.totalorder %s21, 0
      %p62 = por %p60, %p61
      %s63 = ssub.s32 %s23, %s30
      %p64 = scmp.eq.s32.totalorder %s63, 0
      %s66 = sadd.s32 %s65, 1
      %s67 = scalar_select %p64, %s65, %s66
      %p70 = pneg %p64
      %p71 = scmp.eq.s32.totalorder %s15, 7
      %p72 = por %p70, %p71
      %p73 = scmp.ne.s32.totalorder %s65, %s68
      %p74 = scmp.eq.s32.totalorder %s15, 0
      %p75 = por %p73, %p74
      %p76 = scmp.ne.s32.totalorder %s65, %s68
      %p77 = scmp.eq.s32.totalorder %s20, 7
      %p78 = por %p76, %p77
      %p79 = scmp.ne.s32.totalorder %s68, %s69
      %p80 = scmp.eq.s32.totalorder %s20, 0
      %p81 = por %p79, %p80
      %p82 = scmp.ne.s32.totalorder %s68, %s69
      %p83 = scmp.eq.s32.totalorder %s21, 7
      %p84 = por %p82, %p83
      %p86 = scmp.ne.s32.totalorder %s69, %s85
      %p87 = scmp.eq.s32.totalorder %s21, 0
      %p88 = por %p86, %p87
      %s89 = ssub.s32 %s22, %s34
      %p90 = scmp.eq.s32.totalorder %s89, 0
      %s92 = sadd.s32 %s91, 1
      %s93 = scalar_select %p90, %s91, %s92
      %p96 = pneg %p90
      %p97 = scmp.eq.s32.totalorder %s15, 7
      %p98 = por %p96, %p97
      %p99 = scmp.ne.s32.totalorder %s91, %s94
      %p100 = scmp.eq.s32.totalorder %s15, 0
      %p101 = por %p99, %p100
      %p102 = scmp.ne.s32.totalorder %s91, %s94
      %p103 = scmp.eq.s32.totalorder %s20, 7
      %p104 = por %p102, %p103
      %p105 = scmp.ne.s32.totalorder %s94, %s95
      %p106 = scmp.eq.s32.totalorder %s20, 0
      %p107 = por %p105, %p106
      %p108 = scmp.ne.s32.totalorder %s94, %s95
      %p109 = scmp.eq.s32.totalorder %s21, 7
      %p110 = por %p108, %p109
      %p112 = scmp.ne.s32.totalorder %s95, %s111
      %p113 = scmp.eq.s32.totalorder %s21, 0
      %p114 = por %p112, %p113
      %s115 = ssub.s32 %s22, %s34
      %s116 = ssub.s32 %s23, %s30
      %s117 = sor.u32 %s115, %s116
      %p118 = scmp.eq.s32.totalorder %s117, 0
      %s120 = sadd.s32 %s119, 1
      %s121 = scalar_select %p118, %s119, %s120
      %p124 = pneg %p118
      %p125 = scmp.eq.s32.totalorder %s15, 7
      %p126 = por %p124, %p125
      %p127 = scmp.ne.s32.totalorder %s119, %s122
      %p128 = scmp.eq.s32.totalorder %s15, 0
      %p129 = por %p127, %p128
      %p130 = scmp.ne.s32.totalorder %s119, %s122
      %p131 = scmp.eq.s32.totalorder %s20, 7
      %p132 = por %p130, %p131
      %p133 = scmp.ne.s32.totalorder %s122, %s123
      %p134 = scmp.eq.s32.totalorder %s20, 0
      %p135 = por %p133, %p134
      %p136 = scmp.ne.s32.totalorder %s122, %s123
      %p137 = scmp.eq.s32.totalorder %s21, 7
      %p138 = por %p136, %p137
      %p140 = scmp.ne.s32.totalorder %s123, %s139
      %p141 = scmp.eq.s32.totalorder %s21, 0
      %p142 = por %p140, %p141
      %p143 = scmp.le.s32.totalorder 1, %s15
      %p144 = scmp.lt.s32.totalorder %s15, 9
      %p145 = pnand %p143, %p144
      %p146 = pneg %p145
      // Predicated region
      $region9: #{tpu_custom_call.1} parent=5 // pred_check
        _
      $region10: #{tpu_custom_call.1} parent=5 // pred_check_branch
        %148 = sbr.rel (%p145) target = $region12
      $region11: #{tpu_custom_call.1} parent=5 // pred_region
        %s149 = ssub.s32 %s15, 1
      $region12: #{tpu_custom_call.1} parent=5 // pred_fallthru
        _
      %p150 = scmp.lt.s32.totalorder %s15, 8
      // Predicated region
      $region13: #{tpu_custom_call.1} parent=5 // pred_check
        %p151 = pneg %p150
      $region14: #{tpu_custom_call.1} parent=5 // pred_check_branch
        %153 = sbr.rel (%p151) target = $region16
      $region15: #{tpu_custom_call.1} parent=5 // pred_region
        // Predicated region
        $region17: #{tpu_custom_call.1} parent=15 // pred_check
          %p154 = pneg %p49
        $region18: #{tpu_custom_call.1} parent=15 // pred_check_branch
          %156 = sbr.rel (%p154) target = $region20
        $region19: #{tpu_custom_call.1} parent=15 // pred_region
          %s157 = sand.u32 %s39, 1
          %s158 = scalar_lea.sflag [#allocation3], %s157
          %s159 = sand.u32 %s39, 1
          %s160 = smul.addr %s159, 2
          %s161 = scalar_lea.vmem [#allocation2], %s160
          %s162 = smul.u32 2, %s23
          %s164 = ssub.s32 32, 32
          %165 = vsyncadd %s158, %s164
          %s166 = smul.addr %s22, 4
          %s167 = sadd.s32 %s162, %s166
          %s168 = smul.addr %s167, 16
          %s169 = scalar_lea.hbm %s0, %s168
          %s171 = sshll.u32 %s161, 4
          %s172 = int_to_ptr.vmem [resolvable:$true] %s171
          %174 = dma.hbm_to_vmem [thread:$0]  %s169, 32, %s172, %s158
        $region20: #{tpu_custom_call.1} parent=15 // pred_fallthru
          _
        // Predicated region
        $region21: #{tpu_custom_call.1} parent=15 // pred_check
          %p175 = pneg %p75
        $region22: #{tpu_custom_call.1} parent=15 // pred_check_branch
          %177 = sbr.rel (%p175) target = $region24
        $region23: #{tpu_custom_call.1} parent=15 // pred_region
          %s178 = sand.u32 %s15, 1
          %s179 = scalar_lea.sflag [#allocation5], %s178
          %s180 = sand.u32 %s65, 1
          %s181 = smul.addr %s180, 2
          %s182 = scalar_lea.vmem [#allocation4], %s181
          %s184 = ssub.s32 32, 32
          %185 = vsyncadd %s179, %s184
          %s186 = smul.addr %s23, 32
          %s187 = scalar_lea.hbm %s1, %s186
          %s189 = sshll.u32 %s182, 4
          %s190 = int_to_ptr.vmem [resolvable:$true] %s189
          %192 = dma.hbm_to_vmem [thread:$0]  %s187, 32, %s190, %s179
        $region24: #{tpu_custom_call.1} parent=15 // pred_fallthru
          _
        // Predicated region
        $region25: #{tpu_custom_call.1} parent=15 // pred_check
          %p193 = pneg %p101
        $region26: #{tpu_custom_call.1} parent=15 // pred_check_branch
          %195 = sbr.rel (%p193) target = $region28
        $region27: #{tpu_custom_call.1} parent=15 // pred_region
          %s196 = sand.u32 %s15, 1
          %s197 = scalar_lea.sflag [#allocation5], %s196
          %s198 = sand.u32 %s91, 1
          %s199 = smul.addr %s198, 128
          %s200 = scalar_lea.vmem [#allocation6], %s199
          %s202 = ssub.s32 2048, 2048
          %203 = vsyncadd %s197, %s202
          %s204 = smul.addr %s22, 16
          %s205 = smul.addr %s204, 128
          %s206 = scalar_lea.hbm %s2, %s205
          %s207 = sshll.u32 %s200, 4
          %s208 = int_to_ptr.vmem [resolvable:$true] %s207
          %213 = dma.hbm_to_vmem [thread:$0]  %s206, 2048, %s208, %s197, 128, 128, 8
        $region28: #{tpu_custom_call.1} parent=15 // pred_fallthru
          _
      $region16: #{tpu_custom_call.1} parent=5 // pred_fallthru
        _
      %p214 = scmp.le.s32.totalorder 1, %s15
      %p215 = scmp.lt.s32.totalorder %s15, 9
      %p216 = pnand %p214, %p215
      %p217 = pneg %p216
      // Predicated region
      $region29: #{tpu_custom_call.1} parent=5 // pred_check
        _
      $region30: #{tpu_custom_call.1} parent=5 // pred_check_branch
        %219 = sbr.rel (%p216) target = $region32
      $region31: #{tpu_custom_call.1} parent=5 // pred_region
        %s220 = ssub.s32 %s15, 1
        %s221 = sand.u32 %s42, 1
        %s222 = scalar_lea.sflag [#allocation3], %s221
        %s223 = sand.u32 %s42, 1
        %s224 = smul.addr %s223, 2
        %s225 = scalar_lea.vmem [#allocation2], %s224
        // Predicated region
        $region33: #{tpu_custom_call.1} parent=31 // pred_check
          %p226 = pneg %p55
        $region34: #{tpu_custom_call.1} parent=31 // pred_check_branch
          %228 = sbr.rel (%p226) target = $region36
        $region35: #{tpu_custom_call.1} parent=31 // pred_region
          %229 = dma.done %s222, 32
        $region36: #{tpu_custom_call.1} parent=31 // pred_fallthru
          _
        %s230 = sand.u32 %s20, 1
        %s231 = scalar_lea.sflag [#allocation5], %s230
        %s232 = sand.u32 %s68, 1
        %s233 = smul.addr %s232, 2
        %s234 = scalar_lea.vmem [#allocation4], %s233
        // Predicated region
        $region37: #{tpu_custom_call.1} parent=31 // pred_check
          %p235 = pneg %p81
        $region38: #{tpu_custom_call.1} parent=31 // pred_check_branch
          %237 = sbr.rel (%p235) target = $region40
        $region39: #{tpu_custom_call.1} parent=31 // pred_region
          %238 = dma.done %s231, 32
        $region40: #{tpu_custom_call.1} parent=31 // pred_fallthru
          _
        %s239 = sand.u32 %s20, 1
        %s240 = scalar_lea.sflag [#allocation5], %s239
        %s241 = sand.u32 %s94, 1
        %s242 = smul.addr %s241, 128
        %s243 = scalar_lea.vmem [#allocation6], %s242
        // Predicated region
        $region41: #{tpu_custom_call.1} parent=31 // pred_check
          %p244 = pneg %p107
        $region42: #{tpu_custom_call.1} parent=31 // pred_check_branch
          %246 = sbr.rel (%p244) target = $region44
        $region43: #{tpu_custom_call.1} parent=31 // pred_region
          %247 = dma.done %s240, 2048
        $region44: #{tpu_custom_call.1} parent=31 // pred_fallthru
          _
        %s248 = sand.u32 %s42, 1
        %s249 = scalar_lea.sflag [#allocation3], %s248
        %s250 = sand.u32 %s42, 1
        %s251 = smul.addr %s250, 2
        %s252 = scalar_lea.vmem [#allocation2], %s251
        %p253 = pneg %p55
        %p254 = pneg %p52
        %s255 = sand.u32 %s20, 1
        %s256 = scalar_lea.sflag [#allocation5], %s255
        %s257 = sand.u32 %s68, 1
        %s258 = smul.addr %s257, 2
        %s259 = scalar_lea.vmem [#allocation4], %s258
        %p260 = pneg %p81
        %p261 = pneg %p78
        %s262 = sand.u32 %s20, 1
        %s263 = scalar_lea.sflag [#allocation5], %s262
        %s264 = sand.u32 %s94, 1
        %s265 = smul.addr %s264, 128
        %s266 = scalar_lea.vmem [#allocation6], %s265
        %p267 = pneg %p107
        %p268 = pneg %p104
        %p269 = pneg %p135
        %p270 = pneg %p132
        %p271 = scmp.lt.s32.totalorder %s24, 3
        %s272 = scalar_select %p271, %s24, 3
        %p273 = scmp.lt.s32.totalorder %s25, 1
        %s274 = scalar_select %p273, %s25, 1
        %s275 = smul.addr %s272, 2
        %s276 = sadd.s32 %s274, %s275
        %s277 = scalar_lea.vmem %s3, %s276
        %s278 = smul.u32 2, %s25
        %p279 = scmp.lt.s32.totalorder %s24, 3
        %s280 = scalar_select %p279, %s24, 3
        %p281 = scmp.lt.s32.totalorder %s25, 1
        %s282 = scalar_select %p281, %s25, 1
        %s283 = smul.addr %s280, 2
        %s284 = sadd.s32 %s282, %s283
        %s285 = scalar_lea.vmem %s3, %s284
        %v287 = vld [vmem:[%s243] sm:$0xff]
        %v288 = vld [vmem:[%s243 + $0x8] sm:$0xff]
        %v289 = vld [vmem:[%s243 + $0x10] sm:$0xff]
        %v290 = vld [vmem:[%s243 + $0x18] sm:$0xff]
        %v291 = vld [vmem:[%s243 + $0x20] sm:$0xff]
        %v292 = vld [vmem:[%s243 + $0x28] sm:$0xff]
        %v293 = vld [vmem:[%s243 + $0x30] sm:$0xff]
        %v294 = vld [vmem:[%s243 + $0x38] sm:$0xff]
        %v295 = vld [vmem:[%s243 + $0x40] sm:$0xff]
        %v296 = vld [vmem:[%s243 + $0x48] sm:$0xff]
        %v297 = vld [vmem:[%s243 + $0x50] sm:$0xff]
        %v298 = vld [vmem:[%s243 + $0x58] sm:$0xff]
        %v299 = vld [vmem:[%s243 + $0x60] sm:$0xff]
        %v300 = vld [vmem:[%s243 + $0x68] sm:$0xff]
        %v301 = vld [vmem:[%s243 + $0x70] sm:$0xff]
        %v302 = vld [vmem:[%s243 + $0x78] sm:$0xff]
        %v303 = vld [vmem:[%s225] sm:$0x3]
        %v304 = vld [vmem:[%s234] sm:$0x3]
        %v305 = vlaneseq
        %v306 = vshrl.u32 %v305, 7
        %v307 = vadd.s32 %v306, 8
        %v308 = vadd.s32 %v306, 16
        %v309 = vadd.s32 %v306, 24
        %v310 = vadd.s32 %v306, 32
        %v311 = vadd.s32 %v306, 40
        %v312 = vadd.s32 %v306, 48
        %v313 = vadd.s32 %v306, 56
        %v314 = vadd.s32 %v306, 64
        %v315 = vadd.s32 %v306, 72
        %v316 = vadd.s32 %v306, 80
        %v317 = vadd.s32 %v306, 88
        %v318 = vadd.s32 %v306, 96
        %v319 = vadd.s32 %v306, 104
        %v320 = vadd.s32 %v306, 112
        %v321 = vadd.s32 %v306, 120
        %v322 = vlaneseq
        %v323 = vshrl.u32 %v322, 7
        %v324 = vsub.s32 0, %v323
        %v325 = vrot.slane %v303, %v324
        %v326 = vlaneseq
        %v327 = vshrl.u32 %v326, 7
        %v328 = vsub.s32 1, %v327
        %v329 = vrot.slane %v303, %v328
        %vm330 = vcmp.eq.s32.totalorder %v306, %v325
        %vm331 = vcmp.eq.s32.totalorder %v306, %v329
        %vm332 = vcmp.eq.s32.totalorder %v307, %v325
        %vm333 = vcmp.eq.s32.totalorder %v307, %v329
        %vm334 = vcmp.eq.s32.totalorder %v308, %v325
        %vm335 = vcmp.eq.s32.totalorder %v308, %v329
        %vm336 = vcmp.eq.s32.totalorder %v309, %v325
        %vm337 = vcmp.eq.s32.totalorder %v309, %v329
        %vm338 = vcmp.eq.s32.totalorder %v310, %v325
        %vm339 = vcmp.eq.s32.totalorder %v310, %v329
        %vm340 = vcmp.eq.s32.totalorder %v311, %v325
        %vm341 = vcmp.eq.s32.totalorder %v311, %v329
        %vm342 = vcmp.eq.s32.totalorder %v312, %v325
        %vm343 = vcmp.eq.s32.totalorder %v312, %v329
        %vm344 = vcmp.eq.s32.totalorder %v313, %v325
        %vm345 = vcmp.eq.s32.totalorder %v313, %v329
        %vm346 = vcmp.eq.s32.totalorder %v314, %v325
        %vm347 = vcmp.eq.s32.totalorder %v314, %v329
        %vm348 = vcmp.eq.s32.totalorder %v315, %v325
        %vm349 = vcmp.eq.s32.totalorder %v315, %v329
        %vm350 = vcmp.eq.s32.totalorder %v316, %v325
        %vm351 = vcmp.eq.s32.totalorder %v316, %v329
        %vm352 = vcmp.eq.s32.totalorder %v317, %v325
        %vm353 = vcmp.eq.s32.totalorder %v317, %v329
        %vm354 = vcmp.eq.s32.totalorder %v318, %v325
        %vm355 = vcmp.eq.s32.totalorder %v318, %v329
        %vm356 = vcmp.eq.s32.totalorder %v319, %v325
        %vm357 = vcmp.eq.s32.totalorder %v319, %v329
        %vm358 = vcmp.eq.s32.totalorder %v320, %v325
        %vm359 = vcmp.eq.s32.totalorder %v320, %v329
        %vm360 = vcmp.eq.s32.totalorder %v321, %v325
        %vm361 = vcmp.eq.s32.totalorder %v321, %v329
        %v362 = vsel %vm330, 1, 0
        %v363 = vsel %vm331, 1, 0
        %v364 = vsel %vm332, 1, 0
        %v365 = vsel %vm333, 1, 0
        %v366 = vsel %vm334, 1, 0
        %v367 = vsel %vm335, 1, 0
        %v368 = vsel %vm336, 1, 0
        %v369 = vsel %vm337, 1, 0
        %v370 = vsel %vm338, 1, 0
        %v371 = vsel %vm339, 1, 0
        %v372 = vsel %vm340, 1, 0
        %v373 = vsel %vm341, 1, 0
        %v374 = vsel %vm342, 1, 0
        %v375 = vsel %vm343, 1, 0
        %v376 = vsel %vm344, 1, 0
        %v377 = vsel %vm345, 1, 0
        %v378 = vsel %vm346, 1, 0
        %v379 = vsel %vm347, 1, 0
        %v380 = vsel %vm348, 1, 0
        %v381 = vsel %vm349, 1, 0
        %v382 = vsel %vm350, 1, 0
        %v383 = vsel %vm351, 1, 0
        %v384 = vsel %vm352, 1, 0
        %v385 = vsel %vm353, 1, 0
        %v386 = vsel %vm354, 1, 0
        %v387 = vsel %vm355, 1, 0
        %v388 = vsel %vm356, 1, 0
        %v389 = vsel %vm357, 1, 0
        %v390 = vsel %vm358, 1, 0
        %v391 = vsel %vm359, 1, 0
        %v392 = vsel %vm360, 1, 0
        %v393 = vsel %vm361, 1, 0
        %v394 = vcvt.s32.f32 %v362
        %v395 = vcvt.s32.f32 %v363
        %v396 = vcvt.s32.f32 %v364
        %v397 = vcvt.s32.f32 %v365
        %v398 = vcvt.s32.f32 %v366
        %v399 = vcvt.s32.f32 %v367
        %v400 = vcvt.s32.f32 %v368
        %v401 = vcvt.s32.f32 %v369
        %v402 = vcvt.s32.f32 %v370
        %v403 = vcvt.s32.f32 %v371
        %v404 = vcvt.s32.f32 %v372
        %v405 = vcvt.s32.f32 %v373
        %v406 = vcvt.s32.f32 %v374
        %v407 = vcvt.s32.f32 %v375
        %v408 = vcvt.s32.f32 %v376
        %v409 = vcvt.s32.f32 %v377
        %v410 = vcvt.s32.f32 %v378
        %v411 = vcvt.s32.f32 %v379
        %v412 = vcvt.s32.f32 %v380
        %v413 = vcvt.s32.f32 %v381
        %v414 = vcvt.s32.f32 %v382
        %v415 = vcvt.s32.f32 %v383
        %v416 = vcvt.s32.f32 %v384
        %v417 = vcvt.s32.f32 %v385
        %v418 = vcvt.s32.f32 %v386
        %v419 = vcvt.s32.f32 %v387
        %v420 = vcvt.s32.f32 %v388
        %v421 = vcvt.s32.f32 %v389
        %v422 = vcvt.s32.f32 %v390
        %v423 = vcvt.s32.f32 %v391
        %v424 = vcvt.s32.f32 %v392
        %v425 = vcvt.s32.f32 %v393
        %v426 = vpack.c.bf16 %v396, %v394
        %v427 = vpack.c.bf16 %v397, %v395
        %v428 = vpack.c.bf16 %v400, %v398
        %v429 = vpack.c.bf16 %v401, %v399
        %v430 = vpack.c.bf16 %v404, %v402
        %v431 = vpack.c.bf16 %v405, %v403
        %v432 = vpack.c.bf16 %v408, %v406
        %v433 = vpack.c.bf16 %v409, %v407
        %v434 = vpack.c.bf16 %v412, %v410
        %v435 = vpack.c.bf16 %v413, %v411
        %v436 = vpack.c.bf16 %v416, %v414
        %v437 = vpack.c.bf16 %v417, %v415
        %v438 = vpack.c.bf16 %v420, %v418
        %v439 = vpack.c.bf16 %v421, %v419
        %v440 = vpack.c.bf16 %v424, %v422
        %v441 = vpack.c.bf16 %v425, %v423
        %v442 = vpack.c.bf16 %v288, %v287
        %v443 = vpack.c.bf16 %v290, %v289
        %v444 = vpack.c.bf16 %v292, %v291
        %v445 = vpack.c.bf16 %v294, %v293
        %v446 = vpack.c.bf16 %v296, %v295
        %v447 = vpack.c.bf16 %v298, %v297
        %v448 = vpack.c.bf16 %v300, %v299
        %v449 = vpack.c.bf16 %v302, %v301
        %v450 = vunpack.c.l.bf16 %v442
        %v451 = vunpack.c.h.bf16 %v442
        %v452 = vunpack.c.l.bf16 %v443
        %v453 = vunpack.c.h.bf16 %v443
        %v454 = vunpack.c.l.bf16 %v444
        %v455 = vunpack.c.h.bf16 %v444
        %v456 = vunpack.c.l.bf16 %v445
        %v457 = vunpack.c.h.bf16 %v445
        %v458 = vunpack.c.l.bf16 %v446
        %v459 = vunpack.c.h.bf16 %v446
        %v460 = vunpack.c.l.bf16 %v447
        %v461 = vunpack.c.h.bf16 %v447
        %v462 = vunpack.c.l.bf16 %v448
        %v463 = vunpack.c.h.bf16 %v448
        %v464 = vunpack.c.l.bf16 %v449
        %v465 = vunpack.c.h.bf16 %v449
        %v466 = vsub.f32 %v287, %v450
        %v467 = vsub.f32 %v288, %v451
        %v468 = vsub.f32 %v289, %v452
        %v469 = vsub.f32 %v290, %v453
        %v470 = vsub.f32 %v291, %v454
        %v471 = vsub.f32 %v292, %v455
        %v472 = vsub.f32 %v293, %v456
        %v473 = vsub.f32 %v294, %v457
        %v474 = vsub.f32 %v295, %v458
        %v475 = vsub.f32 %v296, %v459
        %v476 = vsub.f32 %v297, %v460
        %v477 = vsub.f32 %v298, %v461
        %v478 = vsub.f32 %v299, %v462
        %v479 = vsub.f32 %v300, %v463
        %v480 = vsub.f32 %v301, %v464
        %v481 = vsub.f32 %v302, %v465
        %v482 = vpack.c.bf16 %v467, %v466
        %v483 = vpack.c.bf16 %v469, %v468
        %v484 = vpack.c.bf16 %v471, %v470
        %v485 = vpack.c.bf16 %v473, %v472
        %v486 = vpack.c.bf16 %v475, %v474
        %v487 = vpack.c.bf16 %v477, %v476
        %v488 = vpack.c.bf16 %v479, %v478
        %v489 = vpack.c.bf16 %v481, %v480
        %v490 = vunpack.c.l.bf16 %v482
        %v491 = vunpack.c.h.bf16 %v482
        %v492 = vunpack.c.l.bf16 %v483
        %v493 = vunpack.c.h.bf16 %v483
        %v494 = vunpack.c.l.bf16 %v484
        %v495 = vunpack.c.h.bf16 %v484
        %v496 = vunpack.c.l.bf16 %v485
        %v497 = vunpack.c.h.bf16 %v485
        %v498 = vunpack.c.l.bf16 %v486
        %v499 = vunpack.c.h.bf16 %v486
        %v500 = vunpack.c.l.bf16 %v487
        %v501 = vunpack.c.h.bf16 %v487
        %v502 = vunpack.c.l.bf16 %v488
        %v503 = vunpack.c.h.bf16 %v488
        %v504 = vunpack.c.l.bf16 %v489
        %v505 = vunpack.c.h.bf16 %v489
        %v506 = vsub.f32 %v466, %v490
        %v507 = vsub.f32 %v467, %v491
        %v508 = vsub.f32 %v468, %v492
        %v509 = vsub.f32 %v469, %v493
        %v510 = vsub.f32 %v470, %v494
        %v511 = vsub.f32 %v471, %v495
        %v512 = vsub.f32 %v472, %v496
        %v513 = vsub.f32 %v473, %v497
        %v514 = vsub.f32 %v474, %v498
        %v515 = vsub.f32 %v475, %v499
        %v516 = vsub.f32 %v476, %v500
        %v517 = vsub.f32 %v477, %v501
        %v518 = vsub.f32 %v478, %v502
        %v519 = vsub.f32 %v479, %v503
        %v520 = vsub.f32 %v480, %v504
        %v521 = vsub.f32 %v481, %v505
        %v522 = vpack.c.bf16 %v507, %v506
        %v523 = vpack.c.bf16 %v509, %v508
        %v524 = vpack.c.bf16 %v511, %v510
        %v525 = vpack.c.bf16 %v513, %v512
        %v526 = vpack.c.bf16 %v515, %v514
        %v527 = vpack.c.bf16 %v517, %v516
        %v528 = vpack.c.bf16 %v519, %v518
        %v529 = vpack.c.bf16 %v521, %v520
        %530 = vmatprep.subr.bf16.mxu0 %v427
        %531 = vmatpush1.bf16.msra.mxu0 %v426
        %532 = vmatprep.subr.bf16.mxu0 %v429
        %533 = vmatpush1.bf16.msra.mxu0 %v428
        %534 = vmatprep.subr.bf16.mxu0 %v431
        %535 = vmatpush1.bf16.msra.mxu0 %v430
        %536 = vmatprep.subr.bf16.mxu0 %v433
        %537 = vmatpush1.bf16.msra.mxu0 %v432
        %538 = vmatprep.subr.bf16.mxu0 %v435
        %539 = vmatpush1.bf16.msra.mxu0 %v434
        %540 = vmatprep.subr.bf16.mxu0 %v437
        %541 = vmatpush1.bf16.msra.mxu0 %v436
        %542 = vmatprep.subr.bf16.mxu0 %v439
        %543 = vmatpush1.bf16.msra.mxu0 %v438
        %544 = vmatprep.subr.bf16.mxu0 %v441
        %545 = vmatpush1.bf16.msra.mxu0 %v440
        %546 = vmatprep.subr.bf16.mxu0 0
        %547 = vmatpush1.bf16.msra.mxu0 0
        %548 = vmatprep.subr.bf16.mxu0 0
        %549 = vmatpush1.bf16.msra.mxu0 0
        %550 = vmatprep.subr.bf16.mxu0 0
        %551 = vmatpush1.bf16.msra.mxu0 0
        %552 = vmatprep.subr.bf16.mxu0 0
        %553 = vmatpush1.bf16.msra.mxu0 0
        %554 = vmatprep.subr.bf16.mxu0 0
        %555 = vmatpush1.bf16.msra.mxu0 0
        %556 = vmatprep.subr.bf16.mxu0 0
        %557 = vmatpush1.bf16.msra.mxu0 0
        %558 = vmatprep.subr.bf16.mxu0 0
        %559 = vmatpush1.bf16.msra.mxu0 0
        %560 = vmatprep.subr.bf16.mxu0 0
        %561 = vmatpush1.bf16.msra.mxu0 0
        %562 = vmatprep.mubr.bf16.mxu0 0
        %563 = vmatmul.mubr.bf16.gmra.mrb[0].mxu0 %v482
        %v564 = vpop.f32.mrb[0].mxu0
        %v565 = vadd.f32 0.0, %v564
        %v566 = vpop.f32.mrb[0].mxu0
        %v567 = vadd.f32 0.0, %v566
        %v568 = vpop.f32.mrb[0].mxu0
        %v569 = vadd.f32 0.0, %v568
        %v570 = vpop.f32.mrb[0].mxu0
        %v571 = vadd.f32 0.0, %v570
        %572 = vmatprep.mubr.bf16.mxu0 0
        %573 = vmatmul.mubr.bf16.gmra.mrb[0].mxu0 %v483
        %v574 = vpop.f32.mrb[0].mxu0
        %v575 = vadd.f32 0.0, %v574
        %v576 = vpop.f32.mrb[0].mxu0
        %v577 = vadd.f32 0.0, %v576
        %v578 = vpop.f32.mrb[0].mxu0
        %v579 = vadd.f32 0.0, %v578
        %v580 = vpop.f32.mrb[0].mxu0
        %v581 = vadd.f32 0.0, %v580
        %582 = vmatprep.mubr.bf16.mxu0 0
        %583 = vmatmul.mubr.bf16.gmra.mrb[0].mxu0 %v484
        %v584 = vpop.f32.mrb[0].mxu0
        %v585 = vadd.f32 0.0, %v584
        %v586 = vpop.f32.mrb[0].mxu0
        %v587 = vadd.f32 0.0, %v586
        %v588 = vpop.f32.mrb[0].mxu0
        %v589 = vadd.f32 0.0, %v588
        %v590 = vpop.f32.mrb[0].mxu0
        %v591 = vadd.f32 0.0, %v590
        %592 = vmatprep.mubr.bf16.mxu0 0
        %593 = vmatmul.mubr.bf16.gmra.mrb[0].mxu0 %v485
        %v594 = vpop.f32.mrb[0].mxu0
        %v595 = vadd.f32 0.0, %v594
        %v596 = vpop.f32.mrb[0].mxu0
        %v597 = vadd.f32 0.0, %v596
        %v598 = vpop.f32.mrb[0].mxu0
        %v599 = vadd.f32 0.0, %v598
        %v600 = vpop.f32.mrb[0].mxu0
        %v601 = vadd.f32 0.0, %v600
        %602 = vmatprep.mubr.bf16.mxu0 0
        %603 = vmatmul.mubr.bf16.gmra.mrb[0].mxu0 %v486
        %v604 = vpop.f32.mrb[0].mxu0
        %v605 = vadd.f32 0.0, %v604
        %v606 = vpop.f32.mrb[0].mxu0
        %v607 = vadd.f32 0.0, %v606
        %v608 = vpop.f32.mrb[0].mxu0
        %v609 = vadd.f32 0.0, %v608
        %v610 = vpop.f32.mrb[0].mxu0
        %v611 = vadd.f32 0.0, %v610
        %612 = vmatprep.mubr.bf16.mxu0 0
        %613 = vmatmul.mubr.bf16.gmra.mrb[0].mxu0 %v487
        %v614 = vpop.f32.mrb[0].mxu0
        %v615 = vadd.f32 0.0, %v614
        %v616 = vpop.f32.mrb[0].mxu0
        %v617 = vadd.f32 0.0, %v616
        %v618 = vpop.f32.mrb[0].mxu0
        %v619 = vadd.f32 0.0, %v618
        %v620 = vpop.f32.mrb[0].mxu0
        %v621 = vadd.f32 0.0, %v620
        %622 = vmatprep.mubr.bf16.mxu0 0
        %623 = vmatmul.mubr.bf16.gmra.mrb[0].mxu0 %v488
        %v624 = vpop.f32.mrb[0].mxu0
        %v625 = vadd.f32 0.0, %v624
        %v626 = vpop.f32.mrb[0].mxu0
        %v627 = vadd.f32 0.0, %v626
        %v628 = vpop.f32.mrb[0].mxu0
        %v629 = vadd.f32 0.0, %v628
        %v630 = vpop.f32.mrb[0].mxu0
        %v631 = vadd.f32 0.0, %v630
        %632 = vmatprep.mubr.bf16.mxu0 0
        %633 = vmatmul.mubr.bf16.gmra.mrb[0].mxu0 %v489
        %v634 = vpop.f32.mrb[0].mxu0
        %v635 = vadd.f32 0.0, %v634
        %v636 = vpop.f32.mrb[0].mxu0
        %v637 = vadd.f32 0.0, %v636
        %v638 = vpop.f32.mrb[0].mxu0
        %v639 = vadd.f32 0.0, %v638
        %v640 = vpop.f32.mrb[0].mxu0
        %v641 = vadd.f32 0.0, %v640
        %642 = vdwg.mxu0
        %643 = vmatprep.subr.bf16.mxu0 %v427
        %644 = vmatpush1.bf16.msra.mxu0 %v426
        %645 = vmatprep.subr.bf16.mxu0 %v429
        %646 = vmatpush1.bf16.msra.mxu0 %v428
        %647 = vmatprep.subr.bf16.mxu0 %v431
        %648 = vmatpush1.bf16.msra.mxu0 %v430
        %649 = vmatprep.subr.bf16.mxu0 %v433
        %650 = vmatpush1.bf16.msra.mxu0 %v432
        %651 = vmatprep.subr.bf16.mxu0 %v435
        %652 = vmatpush1.bf16.msra.mxu0 %v434
        %653 = vmatprep.subr.bf16.mxu0 %v437
        %654 = vmatpush1.bf16.msra.mxu0 %v436
        %655 = vmatprep.subr.bf16.mxu0 %v439
        %656 = vmatpush1.bf16.msra.mxu0 %v438
        %657 = vmatprep.subr.bf16.mxu0 %v441
        %658 = vmatpush1.bf16.msra.mxu0 %v440
        %659 = vmatprep.subr.bf16.mxu0 0
        %660 = vmatpush1.bf16.msra.mxu0 0
        %661 = vmatprep.subr.bf16.mxu0 0
        %662 = vmatpush1.bf16.msra.mxu0 0
        %663 = vmatprep.subr.bf16.mxu0 0
        %664 = vmatpush1.bf16.msra.mxu0 0
        %665 = vmatprep.subr.bf16.mxu0 0
        %666 = vmatpush1.bf16.msra.mxu0 0
        %667 = vmatprep.subr.bf16.mxu0 0
        %668 = vmatpush1.bf16.msra.mxu0 0
        %669 = vmatprep.subr.bf16.mxu0 0
        %670 = vmatpush1.bf16.msra.mxu0 0
        %671 = vmatprep.subr.bf16.mxu0 0
        %672 = vmatpush1.bf16.msra.mxu0 0
        %673 = vmatprep.subr.bf16.mxu0 0
        %674 = vmatpush1.bf16.msra.mxu0 0
        %675 = vmatprep.mubr.bf16.mxu0 0
        %676 = vmatmul.mubr.bf16.gmra.mrb[0].mxu0 %v442
        %v677 = vpop.f32.mrb[0].mxu0
        %v678 = vadd.f32 %v565, %v677
        %v679 = vpop.f32.mrb[0].mxu0
        %v680 = vadd.f32 %v567, %v679
        %v681 = vpop.f32.mrb[0].mxu0
        %v682 = vadd.f32 %v569, %v681
        %v683 = vpop.f32.mrb[0].mxu0
        %v684 = vadd.f32 %v571, %v683
        %685 = vmatprep.mubr.bf16.mxu0 0
        %686 = vmatmul.mubr.bf16.gmra.mrb[0].mxu0 %v443
        %v687 = vpop.f32.mrb[0].mxu0
        %v688 = vadd.f32 %v575, %v687
        %v689 = vpop.f32.mrb[0].mxu0
        %v690 = vadd.f32 %v577, %v689
        %v691 = vpop.f32.mrb[0].mxu0
        %v692 = vadd.f32 %v579, %v691
        %v693 = vpop.f32.mrb[0].mxu0
        %v694 = vadd.f32 %v581, %v693
        %695 = vmatprep.mubr.bf16.mxu0 0
        %696 = vmatmul.mubr.bf16.gmra.mrb[0].mxu0 %v444
        %v697 = vpop.f32.mrb[0].mxu0
        %v698 = vadd.f32 %v585, %v697
        %v699 = vpop.f32.mrb[0].mxu0
        %v700 = vadd.f32 %v587, %v699
        %v701 = vpop.f32.mrb[0].mxu0
        %v702 = vadd.f32 %v589, %v701
        %v703 = vpop.f32.mrb[0].mxu0
        %v704 = vadd.f32 %v591, %v703
        %705 = vmatprep.mubr.bf16.mxu0 0
        %706 = vmatmul.mubr.bf16.gmra.mrb[0].mxu0 %v445
        %v707 = vpop.f32.mrb[0].mxu0
        %v708 = vadd.f32 %v595, %v707
        %v709 = vpop.f32.mrb[0].mxu0
        %v710 = vadd.f32 %v597, %v709
        %v711 = vpop.f32.mrb[0].mxu0
        %v712 = vadd.f32 %v599, %v711
        %v713 = vpop.f32.mrb[0].mxu0
        %v714 = vadd.f32 %v601, %v713
        %715 = vmatprep.mubr.bf16.mxu0 0
        %716 = vmatmul.mubr.bf16.gmra.mrb[0].mxu0 %v446
        %v717 = vpop.f32.mrb[0].mxu0
        %v718 = vadd.f32 %v605, %v717
        %v719 = vpop.f32.mrb[0].mxu0
        %v720 = vadd.f32 %v607, %v719
        %v721 = vpop.f32.mrb[0].mxu0
        %v722 = vadd.f32 %v609, %v721
        %v723 = vpop.f32.mrb[0].mxu0
        %v724 = vadd.f32 %v611, %v723
        %725 = vmatprep.mubr.bf16.mxu0 0
        %726 = vmatmul.mubr.bf16.gmra.mrb[0].mxu0 %v447
        %v727 = vpop.f32.mrb[0].mxu0
        %v728 = vadd.f32 %v615, %v727
        %v729 = vpop.f32.mrb[0].mxu0
        %v730 = vadd.f32 %v617, %v729
        %v731 = vpop.f32.mrb[0].mxu0
        %v732 = vadd.f32 %v619, %v731
        %v733 = vpop.f32.mrb[0].mxu0
        %v734 = vadd.f32 %v621, %v733
        %735 = vmatprep.mubr.bf16.mxu0 0
        %736 = vmatmul.mubr.bf16.gmra.mrb[0].mxu0 %v448
        %v737 = vpop.f32.mrb[0].mxu0
        %v738 = vadd.f32 %v625, %v737
        %v739 = vpop.f32.mrb[0].mxu0
        %v740 = vadd.f32 %v627, %v739
        %v741 = vpop.f32.mrb[0].mxu0
        %v742 = vadd.f32 %v629, %v741
        %v743 = vpop.f32.mrb[0].mxu0
        %v744 = vadd.f32 %v631, %v743
        %745 = vmatprep.mubr.bf16.mxu0 0
        %746 = vmatmul.mubr.bf16.gmra.mrb[0].mxu0 %v449
        %v747 = vpop.f32.mrb[0].mxu0
        %v748 = vadd.f32 %v635, %v747
        %v749 = vpop.f32.mrb[0].mxu0
        %v750 = vadd.f32 %v637, %v749
        %v751 = vpop.f32.mrb[0].mxu0
        %v752 = vadd.f32 %v639, %v751
        %v753 = vpop.f32.mrb[0].mxu0
        %v754 = vadd.f32 %v641, %v753
        %755 = vdwg.mxu0
        %756 = vmatprep.subr.bf16.mxu0 %v427
        %757 = vmatpush1.bf16.msra.mxu0 %v426
        %758 = vmatprep.subr.bf16.mxu0 %v429
        %759 = vmatpush1.bf16.msra.mxu0 %v428
        %760 = vmatprep.subr.bf16.mxu0 %v431
        %761 = vmatpush1.bf16.msra.mxu0 %v430
        %762 = vmatprep.subr.bf16.mxu0 %v433
        %763 = vmatpush1.bf16.msra.mxu0 %v432
        %764 = vmatprep.subr.bf16.mxu0 %v435
        %765 = vmatpush1.bf16.msra.mxu0 %v434
        %766 = vmatprep.subr.bf16.mxu0 %v437
        %767 = vmatpush1.bf16.msra.mxu0 %v436
        %768 = vmatprep.subr.bf16.mxu0 %v439
        %769 = vmatpush1.bf16.msra.mxu0 %v438
        %770 = vmatprep.subr.bf16.mxu0 %v441
        %771 = vmatpush1.bf16.msra.mxu0 %v440
        %772 = vmatprep.subr.bf16.mxu0 0
        %773 = vmatpush1.bf16.msra.mxu0 0
        %774 = vmatprep.subr.bf16.mxu0 0
        %775 = vmatpush1.bf16.msra.mxu0 0
        %776 = vmatprep.subr.bf16.mxu0 0
        %777 = vmatpush1.bf16.msra.mxu0 0
        %778 = vmatprep.subr.bf16.mxu0 0
        %779 = vmatpush1.bf16.msra.mxu0 0
        %780 = vmatprep.subr.bf16.mxu0 0
        %781 = vmatpush1.bf16.msra.mxu0 0
        %782 = vmatprep.subr.bf16.mxu0 0
        %783 = vmatpush1.bf16.msra.mxu0 0
        %784 = vmatprep.subr.bf16.mxu0 0
        %785 = vmatpush1.bf16.msra.mxu0 0
        %786 = vmatprep.subr.bf16.mxu0 0
        %787 = vmatpush1.bf16.msra.mxu0 0
        %788 = vmatprep.mubr.bf16.mxu0 0
        %789 = vmatmul.mubr.bf16.gmra.mrb[0].mxu0 %v522
        %v790 = vpop.f32.mrb[0].mxu0
        %v791 = vadd.f32 0.0, %v790
        %v792 = vpop.f32.mrb[0].mxu0
        %v793 = vadd.f32 0.0, %v792
        %v794 = vpop.f32.mrb[0].mxu0
        %v795 = vadd.f32 0.0, %v794
        %v796 = vpop.f32.mrb[0].mxu0
        %v797 = vadd.f32 0.0, %v796
        %798 = vmatprep.mubr.bf16.mxu0 0
        %799 = vmatmul.mubr.bf16.gmra.mrb[0].mxu0 %v523
        %v800 = vpop.f32.mrb[0].mxu0
        %v801 = vadd.f32 0.0, %v800
        %v802 = vpop.f32.mrb[0].mxu0
        %v803 = vadd.f32 0.0, %v802
        %v804 = vpop.f32.mrb[0].mxu0
        %v805 = vadd.f32 0.0, %v804
        %v806 = vpop.f32.mrb[0].mxu0
        %v807 = vadd.f32 0.0, %v806
        %808 = vmatprep.mubr.bf16.mxu0 0
        %809 = vmatmul.mubr.bf16.gmra.mrb[0].mxu0 %v524
        %v810 = vpop.f32.mrb[0].mxu0
        %v811 = vadd.f32 0.0, %v810
        %v812 = vpop.f32.mrb[0].mxu0
        %v813 = vadd.f32 0.0, %v812
        %v814 = vpop.f32.mrb[0].mxu0
        %v815 = vadd.f32 0.0, %v814
        %v816 = vpop.f32.mrb[0].mxu0
        %v817 = vadd.f32 0.0, %v816
        %818 = vmatprep.mubr.bf16.mxu0 0
        %819 = vmatmul.mubr.bf16.gmra.mrb[0].mxu0 %v525
        %v820 = vpop.f32.mrb[0].mxu0
        %v821 = vadd.f32 0.0, %v820
        %v822 = vpop.f32.mrb[0].mxu0
        %v823 = vadd.f32 0.0, %v822
        %v824 = vpop.f32.mrb[0].mxu0
        %v825 = vadd.f32 0.0, %v824
        %v826 = vpop.f32.mrb[0].mxu0
        %v827 = vadd.f32 0.0, %v826
        %828 = vmatprep.mubr.bf16.mxu0 0
        %829 = vmatmul.mubr.bf16.gmra.mrb[0].mxu0 %v526
        %v830 = vpop.f32.mrb[0].mxu0
        %v831 = vadd.f32 0.0, %v830
        %v832 = vpop.f32.mrb[0].mxu0
        %v833 = vadd.f32 0.0, %v832
        %v834 = vpop.f32.mrb[0].mxu0
        %v835 = vadd.f32 0.0, %v834
        %v836 = vpop.f32.mrb[0].mxu0
        %v837 = vadd.f32 0.0, %v836
        %838 = vmatprep.mubr.bf16.mxu0 0
        %839 = vmatmul.mubr.bf16.gmra.mrb[0].mxu0 %v527
        %v840 = vpop.f32.mrb[0].mxu0
        %v841 = vadd.f32 0.0, %v840
        %v842 = vpop.f32.mrb[0].mxu0
        %v843 = vadd.f32 0.0, %v842
        %v844 = vpop.f32.mrb[0].mxu0
        %v845 = vadd.f32 0.0, %v844
        %v846 = vpop.f32.mrb[0].mxu0
        %v847 = vadd.f32 0.0, %v846
        %848 = vmatprep.mubr.bf16.mxu0 0
        %849 = vmatmul.mubr.bf16.gmra.mrb[0].mxu0 %v528
        %v850 = vpop.f32.mrb[0].mxu0
        %v851 = vadd.f32 0.0, %v850
        %v852 = vpop.f32.mrb[0].mxu0
        %v853 = vadd.f32 0.0, %v852
        %v854 = vpop.f32.mrb[0].mxu0
        %v855 = vadd.f32 0.0, %v854
        %v856 = vpop.f32.mrb[0].mxu0
        %v857 = vadd.f32 0.0, %v856
        %858 = vmatprep.mubr.bf16.mxu0 0
        %859 = vmatmul.mubr.bf16.gmra.mrb[0].mxu0 %v529
        %v860 = vpop.f32.mrb[0].mxu0
        %v861 = vadd.f32 0.0, %v860
        %v862 = vpop.f32.mrb[0].mxu0
        %v863 = vadd.f32 0.0, %v862
        %v864 = vpop.f32.mrb[0].mxu0
        %v865 = vadd.f32 0.0, %v864
        %v866 = vpop.f32.mrb[0].mxu0
        %v867 = vadd.f32 0.0, %v866
        %868 = vdwg.mxu0
        %v869 = vadd.f32 %v678, %v791
        %v870 = vadd.f32 %v680, %v793
        %v871 = vadd.f32 %v682, %v795
        %v872 = vadd.f32 %v684, %v797
        %v873 = vadd.f32 %v688, %v801
        %v874 = vadd.f32 %v690, %v803
        %v875 = vadd.f32 %v692, %v805
        %v876 = vadd.f32 %v694, %v807
        %v877 = vadd.f32 %v698, %v811
        %v878 = vadd.f32 %v700, %v813
        %v879 = vadd.f32 %v702, %v815
        %v880 = vadd.f32 %v704, %v817
        %v881 = vadd.f32 %v708, %v821
        %v882 = vadd.f32 %v710, %v823
        %v883 = vadd.f32 %v712, %v825
        %v884 = vadd.f32 %v714, %v827
        %v885 = vadd.f32 %v718, %v831
        %v886 = vadd.f32 %v720, %v833
        %v887 = vadd.f32 %v722, %v835
        %v888 = vadd.f32 %v724, %v837
        %v889 = vadd.f32 %v728, %v841
        %v890 = vadd.f32 %v730, %v843
        %v891 = vadd.f32 %v732, %v845
        %v892 = vadd.f32 %v734, %v847
        %v893 = vadd.f32 %v738, %v851
        %v894 = vadd.f32 %v740, %v853
        %v895 = vadd.f32 %v742, %v855
        %v896 = vadd.f32 %v744, %v857
        %v897 = vadd.f32 %v748, %v861
        %v898 = vadd.f32 %v750, %v863
        %v899 = vadd.f32 %v752, %v865
        %v900 = vadd.f32 %v754, %v867
        %v901 = vmul.f32 %v869, %v870
        %v902 = vmul.f32 %v871, %v872
        %v903 = vmul.f32 %v873, %v874
        %v904 = vmul.f32 %v875, %v876
        %v905 = vmul.f32 %v877, %v878
        %v906 = vmul.f32 %v879, %v880
        %v907 = vmul.f32 %v881, %v882
        %v908 = vmul.f32 %v883, %v884
        %v909 = vmul.f32 %v885, %v886
        %v910 = vmul.f32 %v887, %v888
        %v911 = vmul.f32 %v889, %v890
        %v912 = vmul.f32 %v891, %v892
        %v913 = vmul.f32 %v893, %v894
        %v914 = vmul.f32 %v895, %v896
        %v915 = vmul.f32 %v897, %v898
        %v916 = vmul.f32 %v899, %v900
        %v917 = vadd.f32 %v901, %v902
        %v918 = vadd.f32 %v917, %v903
        %v919 = vadd.f32 %v918, %v904
        %v920 = vadd.f32 %v919, %v905
        %v921 = vadd.f32 %v920, %v906
        %v922 = vadd.f32 %v921, %v907
        %v923 = vadd.f32 %v922, %v908
        %v924 = vadd.f32 %v923, %v909
        %v925 = vadd.f32 %v924, %v910
        %v926 = vadd.f32 %v925, %v911
        %v927 = vadd.f32 %v926, %v912
        %v928 = vadd.f32 %v927, %v913
        %v929 = vadd.f32 %v928, %v914
        %v930 = vadd.f32 %v929, %v915
        %v931 = vadd.f32 %v930, %v916
        %v932 = vrot.slane %v931, 4
        %v933 = vadd.f32 %v931, %v932
        %v934 = vrot.slane %v933, 2
        %v935 = vadd.f32 %v933, %v934
        %v936 = vrot.slane %v935, 1
        %v937 = vadd.f32 %v935, %v936
        %v938 = vmul.f32 %v304, %v937
        %v939 = vmax.f32 %v938, 0.0
        %v940 = vand.u32 2147483647, %v938
        %v941 = vsub.f32 0.0, %v940
        %v942 = vmul.f32 %v941, 1.442695
        %v943 = vpow.pop %v942
        %v944 = vadd.f32 %v943, 1.0
        %v945 = vlog2.pop %v944
        %v946 = vmul.f32 %v945, 0.6931472
        %v947 = vadd.f32 %v939, %v946
        %v949 = vrot.slane %v947, 7
        %v951 = vmul.f32 %v304, %v949
        %vm952 = vcmask 1041409
        %v953 = vsel %vm952, %v951, 0.0
        %954 = vadd.xlane.f32.xlu0 %v953
        %v955 = vpop.xlane.xlu0 %954
        %vm956 = vcmask 1025
        %957 = vst.msk [vmem:[%s285 - $0x1] sm:$0x2] %vm956, %v955
        %p958 = scmp.lt.s32.totalorder %s24, 3
        %s959 = scalar_select %p958, %s24, 3
        %p960 = scmp.lt.s32.totalorder %s25, 1
        %s961 = scalar_select %p960, %s25, 1
        %s962 = smul.addr %s959, 2
        %s963 = sadd.s32 %s961, %s962
        %s964 = scalar_lea.vmem %s3, %s963
        // Predicated region
        $region45: #{tpu_custom_call.1} parent=31 // pred_check
          %p965 = pneg %p132
        $region46: #{tpu_custom_call.1} parent=31 // pred_check_branch
          %967 = sbr.rel (%p965) target = $region48
        $region47: #{tpu_custom_call.1} parent=31 // pred_region
          _
        $region48: #{tpu_custom_call.1} parent=31 // pred_fallthru
          _
      $region32: #{tpu_custom_call.1} parent=5 // pred_fallthru
        _
      %p968 = scmp.le.s32.totalorder 2, %s15
      // Predicated region
      $region49: #{tpu_custom_call.1} parent=5 // pred_check
        %p969 = pneg %p968
      $region50: #{tpu_custom_call.1} parent=5 // pred_check_branch
        %971 = sbr.rel (%p969) target = $region52
      $region51: #{tpu_custom_call.1} parent=5 // pred_region
        %s972 = ssub.s32 %s15, 2
        // Predicated region
        $region53: #{tpu_custom_call.1} parent=51 // pred_check
          %p973 = pneg %p138
        $region54: #{tpu_custom_call.1} parent=51 // pred_check_branch
          %975 = sbr.rel (%p973) target = $region56
        $region55: #{tpu_custom_call.1} parent=51 // pred_region
          %p976 = scmp.lt.s32.totalorder %s26, 3
          %s977 = scalar_select %p976, %s26, 3
          %p978 = scmp.lt.s32.totalorder %s27, 1
          %s979 = scalar_select %p978, %s27, 1
          %s980 = smul.addr %s977, 2
          %s981 = sadd.s32 %s979, %s980
          %s982 = scalar_lea.vmem %s3, %s981
        $region56: #{tpu_custom_call.1} parent=51 // pred_fallthru
          _
      $region52: #{tpu_custom_call.1} parent=5 // pred_fallthru
        _
    $region6: #{tpu_custom_call.1} parent=1 // loop_footer
      %s19 = sadd.s32 1, %s15
    $region7: #{tpu_custom_call.1} parent=1 // loop_footer_branch
      %14 = sbr.rel target = $region3
    $region8: #{tpu_custom_call.1} parent=1 // loop_exit
      _
    %983 = vsyncpa [#allocation3], 1
    %s984 = scalar_lea.sflag [#allocation3], 1
    %985 = vsyncpa %s984, 1
    %986 = vsyncpa [#allocation5], 1
    %s987 = scalar_lea.sflag [#allocation5], 1
    %988 = vsyncpa %s987, 1

</llo_original>
